<compile_context>
chip_gen: v7x
topology: tpu7x:2x2x1
jax: 0.10.0
libtpu: 0.0.40
codegen_flags: <defaults>
</compile_context>

<pallas_src>
import functools

import jax
import jax.numpy as jnp
from jax.experimental import pallas as pl
from jax.experimental.pallas import tpu as pltpu


def _rel_pos_emb_kernel(cph_ref, out_ref, *, length, tm, f, lf):
    """One grid step writes `tm` consecutive output rows i.

    cph_ref: [f, Nq, f*D]   phase-shifted, lane-packed expanded table
                            (resident; constant block index).  Phase p,
                            packed-row q holds the flattened rows
                            C[f*q + p : f*q + p + f, :]  of
                            C[u, :] = table[clamp(L-1-u, -K, K) + K, :].
    out_ref: [tm, L//f, f*D] packed output row tile:
                            out[i, jb, p*D:(p+1)*D] = emb[i, jb*f + p, :].
    """
    i0 = pl.program_id(0) * tm

    def body(r, carry):
        # Clamp for a possibly partial last tile; the out-of-range rows of the
        # block are discarded by Pallas on writeback.
        i = jnp.minimum(i0 + r, length - 1)
        s = (length - 1) - i          # row offset into the expanded table C
        if f == 1:
            # Plain layout: out[i, :, :] = C[s : s + L, :]
            out_ref[r] = cph_ref[0, pl.ds(s, lf), :]
        else:
            # Lane-packed layout: phase = s mod f, start = s div f.
            # f is a power of two -> pure scalar and/shift, no div/mod.
            p = s & (f - 1)
            q = s >> (f.bit_length() - 1)
            out_ref[r] = cph_ref[p, pl.ds(q, lf), :]
        return carry

    # Unrolled so loads/stores of adjacent rows interleave (LLO visibility).
    jax.lax.fori_loop(0, tm, body, 0, unroll=min(8, tm))
    # TODO(synk): dropout with p > 0.0 would need pltpu.prng_* here; the
    # module default p=0.0 is identity, so it is omitted.


def relative_position_embeddings(table, length, max_rel_pos, *, tm=None,
                                 tile_bytes=4 << 20):
    """table: [2*max_rel_pos + 1, D] -> returns [length, length, D]."""
    V, D = table.shape
    assert V == 2 * max_rel_pos + 1
    L = int(length)
    itemsize = jnp.dtype(table.dtype).itemsize

    # --- Expanded table (hoisted out of the kernel; tiny XLA gather):
    #   C[u, :] = table[clamp(L-1-u, -K, K) + K, :],  u in [0, 2L-1)
    # so that out[i, j, :] = C[(L-1-i) + j, :].
    u = jnp.arange(2 * L - 1)
    cidx = jnp.clip((L - 1) - u, -max_rel_pos, max_rel_pos) + max_rel_pos
    c = table[cidx]                                       # [2L-1, D]

    # --- Lane-dense packing factor (full 128-lane stores when D < 128).
    if D < 128 and 128 % D == 0 and L % (128 // D) == 0:
        f = 128 // D
    else:
        f = 1
    lf = L // f
    nq = (L - 1) // f + lf                                # packed rows / phase
    pad = (f - 1) + f * nq - (2 * L - 1)                  # 0 <= pad < f
    if pad:
        c = jnp.pad(c, ((0, pad), (0, 0)))                # padding never read
    # phases[p, q, :] = flatten(C[f*q + p : f*q + p + f, :])
    phases = jnp.stack(
        [c[p:p + f * nq].reshape(nq, f * D) for p in range(f)], axis=0)

    # --- Row tile size.
    row_bytes = L * D * itemsize
    if tm is None:
        # ~tile_bytes of output per step (amortizes ~0.35us/step overhead) but
        # keep >= ~8 grid steps so both v7x TensorCores get work.
        tm = max(1, tile_bytes // max(1, row_bytes))
        tm = min(tm, max(1, pl.cdiv(L, 8)))
    tm = int(min(tm, L))
    grid = pl.cdiv(L, tm)

    phases_bytes = int(phases.size) * itemsize
    out_bytes = L * L * D * itemsize
    # Explicit scoped-VMEM budget: double-buffered output tile + phases
    # (double-buffered by default though never re-fetched) + margin; kept
    # under v7x's 64 MiB physical VMEM.
    vmem_needed = 2 * tm * row_bytes + 2 * phases_bytes + (2 << 20)
    vmem_limit = int(min(max(vmem_needed, 32 << 20), 48 << 20))

    kernel = functools.partial(
        _rel_pos_emb_kernel, length=L, tm=tm, f=f, lf=lf)

    out_packed = pl.pallas_call(
        kernel,
        out_shape=jax.ShapeDtypeStruct((L, lf, f * D), table.dtype),
        grid=(grid,),
        in_specs=[
            # Constant block index -> resident, never re-DMA'd across steps.
            # TODO(synk): pipeline_mode=pl.Buffered(1) would drop the unused
            # second buffer of this input for very large L*D on v7x's 64 MiB.
            pl.BlockSpec((f, nq, f * D), lambda i: (0, 0, 0)),
        ],
        out_specs=pl.BlockSpec((tm, lf, f * D), lambda i: (i, 0, 0)),
        compiler_params=pltpu.CompilerParams(
            dimension_semantics=("parallel",),
            vmem_limit_bytes=vmem_limit,
        ),
        cost_estimate=pl.CostEstimate(
            flops=0, transcendentals=0,
            bytes_accessed=int(out_bytes + phases_bytes)),
    )(phases)

    # Unpack lanes back to [L, L, D] (contiguous reshape, effectively free).
    return out_packed.reshape(L, L, D)


def _reference(table, length, max_rel_pos):
    r = jnp.arange(length)
    dist = r[:, None] - r[None, :]
    idx = jnp.clip(dist, -max_rel_pos, max_rel_pos) + max_rel_pos
    return table[idx]


if __name__ == "__main__":
    # Small, deterministic setup consistent with the module's __init__.
    max_relative_position = 4          # -> 2*4 + 1 = 9 embeddings
    embedding_dim = 32
    length = 8

    key = jax.random.PRNGKey(0)
    # Deterministic stand-in for embedding_init (normal init).
    table = jax.random.normal(
        key, (2 * max_relative_position + 1, embedding_dim), dtype=jnp.float32
    ) * 0.02

    out = relative_position_embeddings(table, length, max_relative_position)
    out = jax.block_until_ready(out)
    ref = _reference(table, length, max_relative_position)
    assert out.shape == (length, length, embedding_dim)
    assert jnp.allclose(out, ref, atol=1e-6), "mismatch vs reference (packed)"

    # Fallback (non-lane-packed) path with a partial last row tile.
    table2 = jax.random.normal(
        jax.random.PRNGKey(0), (2 * 3 + 1, 16), dtype=jnp.float32
    )
    out2 = jax.block_until_ready(
        relative_position_embeddings(table2, 20, 3, tm=8)
    )
    assert jnp.allclose(out2, _reference(table2, 20, 3), atol=1e-6), (
        "mismatch vs reference (fallback/tiled)")

    # Lane-packed path with f=2 and multiple auto-sized row tiles.
    table3 = jax.random.normal(
        jax.random.PRNGKey(0), (2 * 5 + 1, 64), dtype=jnp.float32
    )
    out3 = jax.block_until_ready(
        relative_position_embeddings(table3, 16, 5)
    )
    assert jnp.allclose(out3, _reference(table3, 16, 5), atol=1e-6), (
        "mismatch vs reference (packed f=2)")

    print("KERNEL_OK")
</pallas_src>

<mosaic_0001>
module attributes {stable_mosaic.version = 11 : i64} {
  func.func @_rel_pos_emb_kernel(%arg0: i32, %arg1: memref<4x3x128xf32, #tpu.memory_space<vmem>>, %arg2: memref<1x2x128xf32, #tpu.memory_space<vmem>>) attributes {dimension_semantics = [#tpu.dimension_semantics<parallel>], iteration_bounds = array<i64: 8>, scalar_prefetch = 0 : i64, scratch_operands = 0 : i64, tpu.core_type = #tpu.core_type<tc>, window_params = [{pipeline_mode = #tpu.pipeline_mode<synchronous>, transform_indices = @transform_0, window_bounds = array<i64: 4, 3, 128>}, {transform_indices = @transform_1, window_bounds = array<i64: 1, 2, 128>}]} {
    %c1_i32 = arith.constant 1 : i32
    %0 = arith.muli %arg0, %c1_i32 : i32
    %c0_i32 = arith.constant 0 : i32
    %1 = arith.addi %0, %c0_i32 : i32
    %c7_i32 = arith.constant 7 : i32
    %2 = arith.minsi %1, %c7_i32 : i32
    %c7_i32_0 = arith.constant 7 : i32
    %3 = arith.subi %c7_i32_0, %2 : i32
    %c3_i32 = arith.constant 3 : i32
    %4 = arith.andi %3, %c3_i32 : i32
    %c2_i32 = arith.constant 2 : i32
    %5 = arith.shrsi %3, %c2_i32 : i32
    %6 = arith.index_cast %4 : i32 to index
    %7 = arith.index_cast %5 : i32 to index
    %c0 = arith.constant 0 : index
    %8 = vector.load %arg1[%6, %7, %c0] : memref<4x3x128xf32, #tpu.memory_space<vmem>>, vector<1x2x128xf32>
    %9 = vector.shape_cast %8 : vector<1x2x128xf32> to vector<2x128xf32>
    %10 = arith.index_cast %c0_i32 : i32 to index
    %c0_1 = arith.constant 0 : index
    %c0_2 = arith.constant 0 : index
    %11 = vector.load %arg2[%10, %c0_1, %c0_2] : memref<1x2x128xf32, #tpu.memory_space<vmem>>, vector<1x2x128xf32>
    %12 = vector.shape_cast %11 : vector<1x2x128xf32> to vector<2x128xf32>
    %13 = vector.shape_cast %9 : vector<2x128xf32> to vector<1x2x128xf32>
    tpu.vector_store %arg2[%10, %c0_1, %c0_2], %13 {strides = array<i32>} : memref<1x2x128xf32, #tpu.memory_space<vmem>>, vector<1x2x128xf32>,
    %c1_i32_3 = arith.constant 1 : i32
    return
  }
  func.func @transform_0(%arg0: i32) -> (i32, i32, i32) {
    %c0_i32 = arith.constant 0 : i32
    %c0_i32_0 = arith.constant 0 : i32
    %c0_i32_1 = arith.constant 0 : i32
    %c0_i32_2 = arith.constant 0 : i32
    return %c0_i32, %c0_i32_0, %c0_i32_1 : i32, i32, i32
  }
  func.func @transform_1(%arg0: i32) -> (i32, i32, i32) {
    %c0_i32 = arith.constant 0 : i32
    %c0_i32_0 = arith.constant 0 : i32
    %c0_i32_1 = arith.constant 0 : i32
    return %arg0, %c0_i32, %c0_i32_0 : i32, i32, i32
  }
}

</mosaic_0001>

<llo_original>
// kernel: tpu_custom_call.1
$region0: #{tpu_custom_call.1}
  #allocation0 [shape = 'u32[]', space=smem, size = 0x4, offset = 0x4, fixed_abs, tag = 'smem constant byte address 0x4 - core index']
  #allocation1 [shape = 'u32[144,128]{1,0:T(1,128)}', space=vmem, size = 0x12000, scoped, tag = 'internal scratch']
  %s0 = inlined_call_operand.vmem [shape: f32[4,3,128], index: 0, kind: input, shape index: {}]
  %s1 = inlined_call_operand.hbm [shape: f32[8,2,128], index: 1, kind: output, shape index: {}]
  %s2 = sld [smem:[#allocation0]]
  $region37: #{tpu_custom_call.1} parent=0
    _
  %s4 = ssub.s32 1, %s2
  %s5 = scalar_select 0, %s4, %s2
  $region1: #{tpu_custom_call.1} parent=0
    #allocation2 [shape = 'u8[2048]{0}', space=vmem, size = 0x800, scoped, tag = 'output window, operand 0']
    #allocation3 [shape = 's32[2]{0}', space=sflag, size = 0x8, scoped, tag = 'scoped memory for tpu_custom_call.1']
    %6 = vsyncpa [#allocation3], 0
    %s7 = scalar_lea.sflag [#allocation3], 1
    %8 = vsyncpa %s7, 0
    loop: start=0, step=1, limit=10
    $region2: #{tpu_custom_call.1} parent=1 // loop_pre_header
      _
    $region3: #{tpu_custom_call.1} parent=1 // loop_header
      %s10 = sphi 0, %s14
      %p11 = scmp.ge.s32.totalorder %s10, 10
      %s18 = sphi 0, %s18
      %s20 = sphi 0, %s18
      %s21 = sphi 0, %s20
      %s35 = sphi 0, %s21
      %s41 = sphi 0, %s43
      %s44 = sphi 0, %s41
      %s45 = sphi 0, %s44
      %s61 = sphi 0, %s45
    $region4: #{tpu_custom_call.1} parent=1 // loop_header_branch
      %13 = sbr.rel (%p11) target = $region8
    $region5: #{tpu_custom_call.1} parent=1 // loop_body
      %s15 = ssub.s32 %s10, 1
      %s16 = ssub.s32 %s10, 2
      %s17 = sadd.s32 %s10, 1
      %s19 = sadd.s32 %s18, 1
      %p22 = scmp.eq.s32.totalorder %s10, 7
      %p23 = scmp.ne.s32.totalorder %s18, %s20
      %p24 = scmp.eq.s32.totalorder %s10, 0
      %p25 = por %p23, %p24
      %p26 = scmp.ne.s32.totalorder %s18, %s20
      %p27 = scmp.eq.s32.totalorder %s15, 7
      %p28 = por %p26, %p27
      %p29 = scmp.ne.s32.totalorder %s20, %s21
      %p30 = scmp.eq.s32.totalorder %s15, 0
      %p31 = por %p29, %p30
      %p32 = scmp.ne.s32.totalorder %s20, %s21
      %p33 = scmp.eq.s32.totalorder %s16, 7
      %p34 = por %p32, %p33
      %p36 = scmp.ne.s32.totalorder %s21, %s35
      %p37 = scmp.eq.s32.totalorder %s16, 0
      %p38 = por %p36, %p37
      %s39 = ssub.s32 %s10, %s17
      %p40 = scmp.eq.s32.totalorder %s39, 0
      %s42 = sadd.s32 %s41, 1
      %s43 = scalar_select %p40, %s41, %s42
      %p46 = pneg %p40
      %p47 = scmp.eq.s32.totalorder %s10, 7
      %p48 = por %p46, %p47
      %p49 = scmp.ne.s32.totalorder %s41, %s44
      %p50 = scmp.eq.s32.totalorder %s10, 0
      %p51 = por %p49, %p50
      %p52 = scmp.ne.s32.totalorder %s41, %s44
      %p53 = scmp.eq.s32.totalorder %s15, 7
      %p54 = por %p52, %p53
      %p55 = scmp.ne.s32.totalorder %s44, %s45
      %p56 = scmp.eq.s32.totalorder %s15, 0
      %p57 = por %p55, %p56
      %p58 = scmp.ne.s32.totalorder %s44, %s45
      %p59 = scmp.eq.s32.totalorder %s16, 7
      %p60 = por %p58, %p59
      %p62 = scmp.ne.s32.totalorder %s45, %s61
      %p63 = scmp.eq.s32.totalorder %s16, 0
      %p64 = por %p62, %p63
      %p65 = scmp.le.s32.totalorder 1, %s10
      %p66 = scmp.lt.s32.totalorder %s10, 9
      %p67 = pnand %p65, %p66
      %p68 = pneg %p67
      // Predicated region
      $region9: #{tpu_custom_call.1} parent=5 // pred_check
        _
      $region10: #{tpu_custom_call.1} parent=5 // pred_check_branch
        %70 = sbr.rel (%p67) target = $region12
      $region11: #{tpu_custom_call.1} parent=5 // pred_region
        %s71 = ssub.s32 %s10, 1
        // Predicated region
        $region13: #{tpu_custom_call.1} parent=11 // pred_check
          %p72 = pneg %p31
        $region14: #{tpu_custom_call.1} parent=11 // pred_check_branch
          %74 = sbr.rel (%p72) target = $region16
        $region15: #{tpu_custom_call.1} parent=11 // pred_region
          _
        $region16: #{tpu_custom_call.1} parent=11 // pred_fallthru
          _
      $region12: #{tpu_custom_call.1} parent=5 // pred_fallthru
        _
      %p75 = scmp.lt.s32.totalorder %s10, 8
      // Predicated region
      $region17: #{tpu_custom_call.1} parent=5 // pred_check
        %p76 = pneg %p75
      $region18: #{tpu_custom_call.1} parent=5 // pred_check_branch
        %78 = sbr.rel (%p76) target = $region20
      $region19: #{tpu_custom_call.1} parent=5 // pred_region
        _
      $region20: #{tpu_custom_call.1} parent=5 // pred_fallthru
        _
      %p79 = scmp.le.s32.totalorder 1, %s10
      %p80 = scmp.lt.s32.totalorder %s10, 9
      %p81 = pnand %p79, %p80
      %p82 = pneg %p81
      // Predicated region
      $region21: #{tpu_custom_call.1} parent=5 // pred_check
        _
      $region22: #{tpu_custom_call.1} parent=5 // pred_check_branch
        %84 = sbr.rel (%p81) target = $region24
      $region23: #{tpu_custom_call.1} parent=5 // pred_region
        %s85 = ssub.s32 %s10, 1
        %p86 = pneg %p31
        %p87 = pneg %p28
        %p88 = pneg %p57
        %p89 = pneg %p54
        %s90 = sand.u32 %s44, 1
        %s91 = scalar_lea.sflag [#allocation3], %s90
        %s92 = sand.u32 %s44, 1
        %s93 = smul.addr %s92, 2
        %s94 = scalar_lea.vmem [#allocation2], %s93
        %p95 = scmp.lt.s32.totalorder %s15, 7
        %s96 = scalar_select %p95, %s15, 7
        %s97 = ssub.s32 7, %s96
        %s98 = sand.u32 %s97, 3
        %s99 = sshra.s32 %s97, 2
        %s100 = smul.u32 %s98, 4
        %s101 = sadd.s32 %s99, %s100
        %s102 = scalar_lea.vmem %s0, %s101
        %v103 = vld [vmem:[%s102] sm:$0x3]
        %104 = vst [vmem:[%s94] sm:$0x3] %v103
        %s105 = sand.u32 %s44, 1
        %s106 = scalar_lea.sflag [#allocation3], %s105
        %s107 = sand.u32 %s44, 1
        %s108 = smul.addr %s107, 2
        %s109 = scalar_lea.vmem [#allocation2], %s108
        // Predicated region
        $region25: #{tpu_custom_call.1} parent=23 // pred_check
          %p110 = pneg %p54
        $region26: #{tpu_custom_call.1} parent=23 // pred_check_branch
          %112 = sbr.rel (%p110) target = $region28
        $region27: #{tpu_custom_call.1} parent=23 // pred_region
          %s114 = ssub.s32 32, 32
          %115 = vsyncadd %s106, %s114
          %s116 = smul.addr %s15, 32
          %s117 = scalar_lea.hbm %s1, %s116
          %s119 = sshll.u32 %s109, 4
          %s120 = int_to_ptr.vmem [resolvable:$true] %s119
          %122 = dma.vmem_to_hbm [thread:$0]  %s120, 32, %s117, %s106
        $region28: #{tpu_custom_call.1} parent=23 // pred_fallthru
          _
      $region24: #{tpu_custom_call.1} parent=5 // pred_fallthru
        _
      %p123 = scmp.le.s32.totalorder 2, %s10
      // Predicated region
      $region29: #{tpu_custom_call.1} parent=5 // pred_check
        %p124 = pneg %p123
      $region30: #{tpu_custom_call.1} parent=5 // pred_check_branch
        %126 = sbr.rel (%p124) target = $region32
      $region31: #{tpu_custom_call.1} parent=5 // pred_region
        %s127 = ssub.s32 %s10, 2
        // Predicated region
        $region33: #{tpu_custom_call.1} parent=31 // pred_check
          %p128 = pneg %p60
        $region34: #{tpu_custom_call.1} parent=31 // pred_check_branch
          %130 = sbr.rel (%p128) target = $region36
        $region35: #{tpu_custom_call.1} parent=31 // pred_region
          %s131 = sand.u32 %s45, 1
          %s132 = scalar_lea.sflag [#allocation3], %s131
          %s133 = sand.u32 %s45, 1
          %s134 = smul.addr %s133, 2
          %s135 = scalar_lea.vmem [#allocation2], %s134
          %136 = dma.done %s132, 32
        $region36: #{tpu_custom_call.1} parent=31 // pred_fallthru
          _
      $region32: #{tpu_custom_call.1} parent=5 // pred_fallthru
        _
    $region6: #{tpu_custom_call.1} parent=1 // loop_footer
      %s14 = sadd.s32 1, %s10
    $region7: #{tpu_custom_call.1} parent=1 // loop_footer_branch
      %9 = sbr.rel target = $region3
    $region8: #{tpu_custom_call.1} parent=1 // loop_exit
      _
    %137 = vsyncpa [#allocation3], 1
    %s138 = scalar_lea.sflag [#allocation3], 1
    %139 = vsyncpa %s138, 1

</llo_original>
